<compile_context>
chip_gen: v5e
topology: v5e:2x2
jax: 0.10.0
libtpu: 0.0.40
codegen_flags: <defaults>
</compile_context>

<pallas_src>
import jax
import jax.numpy as jnp
from jax import lax
from jax.experimental import pallas as pl
from jax.experimental.pallas import tpu as pltpu


def _fused_kernel(x_ref, wm_ref, c_ref, o_ref):
    x = x_ref[...]                                   # (TB, K) f32, lane-dense
    wm = wm_ref[...]                                 # (1, K)  f32
    c = c_ref[0, 0]                                  # SMEM scalar
    # Row-dot on the VPU + cross-lane reduce (XLU). No MXU, no (N,K) weight.
    s = jnp.sum(x * wm, axis=1, keepdims=True) + c   # (TB, 1)
    # logsumexp over a singleton dim is the identity -> nothing to do.
    # Exact GELU (erf formulation, matches torch F.gelu default).
    inv_sqrt2 = jnp.float32(0.7071067811865476)
    g = 0.5 * s * (1.0 + lax.erf(s * inv_sqrt2))     # (TB, 1)
    # Residual add: broadcast per-row scalar onto the lane-dense (TB, K) tile.
    o_ref[...] = (x + g).astype(o_ref.dtype)


def _pick_tb(B, cap=512):
    """Largest row tile that is a multiple of 8, divides B, is <= cap, and
    (when B >= 16) leaves at least 2 grid tiles so megacore can split work."""
    if B <= 8 or B % 8 != 0:
        return B
    start = min(cap, B)
    if B >= 16:
        start = min(start, (B // 2) // 8 * 8)
    for cand in range(start, 7, -8):
        if B % cand == 0:
            return cand
    return B


def precompute_collapse(weight, bias, subtract):
    """One-time collapse of (weight, bias, subtract) -> (w_mean (1,K), c (1,1)).
    Cache these for static weights: this is the dominant HBM traffic otherwise."""
    K = weight.shape[1]
    w_mean = jnp.mean(weight.astype(jnp.float32), axis=0).reshape(1, K)
    c = jnp.mean(bias.astype(jnp.float32)
                 - subtract.astype(jnp.float32)).reshape(1, 1)
    return w_mean, c


def fused_forward(x, w_mean, c, *, tb=None, donate_x=False):
    """The Pallas kernel call: x (B,K), w_mean (1,K), c (1,1) -> (B,K)."""
    B, K = x.shape

    if tb is None:
        tb = _pick_tb(B)
    # Blocks equal to the full array dims are exempt from the (8,128) rule;
    # otherwise keep row tiles a multiple of 8.
    if tb <= 0 or B % tb != 0 or (tb != B and tb % 8 != 0):
        tb = B
    grid = (B // tb,)

    cost = pl.CostEstimate(
        flops=2 * B * K + 8 * B,
        transcendentals=B,
        bytes_accessed=(2 * B * K + K + 1) * 4,
    )

    kwargs = {}
    if donate_x:
        # Only beneficial when the caller actually donates x; otherwise XLA
        # inserts a defensive copy, so this is opt-in.
        kwargs["input_output_aliases"] = {0: 0}

    return pl.pallas_call(
        _fused_kernel,
        out_shape=jax.ShapeDtypeStruct((B, K), x.dtype),
        grid=grid,
        in_specs=[
            pl.BlockSpec((tb, K), lambda i: (i, 0)),                 # x tile
            pl.BlockSpec((1, K), lambda i: (0, 0)),                  # w_mean
            pl.BlockSpec(memory_space=pltpu.MemorySpace.SMEM),       # scalar c
        ],
        out_specs=pl.BlockSpec((tb, K), lambda i: (i, 0)),
        compiler_params=pltpu.CompilerParams(
            dimension_semantics=("parallel",),
        ),
        cost_estimate=cost,
        **kwargs,
    )(x, w_mean, c)


@jax.jit
def model_forward(x, weight, bias, subtract):
    """Convenience one-shot path mirroring module_fn(x, weight, bias, subtract).
    For repeated inference with static weights, call precompute_collapse once
    and reuse fused_forward directly."""
    w_mean, c = precompute_collapse(weight, bias, subtract)
    return fused_forward(x, w_mean, c)


def _reference(x, weight, bias, subtract):
    # Pure-JAX reference mirroring module_fn semantics exactly.
    logits = x @ weight.T + bias - subtract
    s = jnp.mean(logits, axis=1, keepdims=True)
    s = jax.nn.logsumexp(s, axis=1, keepdims=True)   # identity on singleton dim
    g = 0.5 * s * (1.0 + lax.erf(s / jnp.sqrt(2.0)))
    return x + g


if __name__ == "__main__":
    # Module constants: in_features=1024, out_features=512; small batch.
    batch, in_features, out_features = 64, 1024, 512

    key = jax.random.PRNGKey(0)
    k_x, k_w, k_b, k_s = jax.random.split(key, 4)

    x = jax.random.normal(k_x, (batch, in_features), dtype=jnp.float32)
    bound = 1.0 / (in_features ** 0.5)
    weight = jax.random.uniform(k_w, (out_features, in_features),
                                minval=-bound, maxval=bound, dtype=jnp.float32)
    bias = jax.random.uniform(k_b, (out_features,),
                              minval=-bound, maxval=bound, dtype=jnp.float32)
    subtract = jax.random.normal(k_s, (out_features,), dtype=jnp.float32) * 0.02

    # Reference computed up-front (also keeps the check safe if donation is
    # ever turned on).
    ref = _reference(x, weight, bias, subtract)

    # One-shot (jitted) path.
    out = jax.block_until_ready(model_forward(x, weight, bias, subtract))
    assert out.shape == (batch, in_features)
    # NOTE: the algebraic collapse reassociates float sums; ~1e-5-level drift
    # vs. the reference is expected, covered by atol=2e-4.
    assert jnp.allclose(out, ref, atol=2e-4, rtol=1e-4), "mismatch (one-shot)"

    # Cached-weights path (the intended deployment: collapse computed once).
    w_mean, c = precompute_collapse(weight, bias, subtract)
    w_mean, c = jax.block_until_ready((w_mean, c))
    out2 = jax.block_until_ready(
        jax.jit(lambda a, wm, cc: fused_forward(a, wm, cc))(x, w_mean, c))
    assert jnp.allclose(out2, ref, atol=2e-4, rtol=1e-4), "mismatch (cached)"

    print("KERNEL_OK")
</pallas_src>

<mosaic_0001>
module attributes {stable_mosaic.version = 11 : i64} {
  func.func @_fused_kernel(%arg0: i32, %arg1: memref<32x1024xf32, #tpu.memory_space<vmem>>, %arg2: memref<1x1024xf32, #tpu.memory_space<vmem>>, %arg3: memref<1x1xf32, #tpu.memory_space<smem>>, %arg4: memref<32x1024xf32, #tpu.memory_space<vmem>>) attributes {dimension_semantics = [#tpu.dimension_semantics<parallel>], iteration_bounds = array<i64: 2>, scalar_prefetch = 0 : i64, scratch_operands = 0 : i64, tpu.core_type = #tpu.core_type<tc>, window_params = [{transform_indices = @transform_0, window_bounds = array<i64: 32, 1024>}, {pipeline_mode = #tpu.pipeline_mode<synchronous>, transform_indices = @transform_1, window_bounds = array<i64: 1, 1024>}, {transform_indices = @transform_2, window_bounds = array<i64: 1, 1>}, {transform_indices = @transform_3, window_bounds = array<i64: 32, 1024>}]} {
    %c0 = arith.constant 0 : index
    %c0_0 = arith.constant 0 : index
    %0 = vector.load %arg1[%c0, %c0_0] : memref<32x1024xf32, #tpu.memory_space<vmem>>, vector<32x1024xf32>
    %c0_1 = arith.constant 0 : index
    %c0_2 = arith.constant 0 : index
    %1 = vector.load %arg2[%c0_1, %c0_2] : memref<1x1024xf32, #tpu.memory_space<vmem>>, vector<1x1024xf32>
    %c0_3 = arith.constant 0 : index
    %c0_4 = arith.constant 0 : index
    %2 = memref.load %arg3[%c0_3, %c0_4] : memref<1x1xf32, #tpu.memory_space<smem>>
    %3 = vector.broadcast %1 : vector<1x1024xf32> to vector<32x1024xf32>
    %4 = arith.mulf %0, %3 : vector<32x1024xf32>
    %cst = arith.constant dense<0.000000e+00> : vector<32xf32>
    %5 = vector.multi_reduction <add>, %4, %cst [1] : vector<32x1024xf32> to vector<32xf32>
    %6 = vector.shape_cast %5 : vector<32xf32> to vector<32x1xf32>
    %7 = vector.broadcast %2 : f32 to vector<32x1xf32>
    %8 = arith.addf %6, %7 : vector<32x1xf32>
    %cst_5 = arith.constant 5.000000e-01 : f32
    %9 = vector.broadcast %cst_5 : f32 to vector<32x1xf32>
    %10 = arith.mulf %9, %8 : vector<32x1xf32>
    %cst_6 = arith.constant 0.707106769 : f32
    %11 = vector.broadcast %cst_6 : f32 to vector<32x1xf32>
    %12 = arith.mulf %8, %11 : vector<32x1xf32>
    %13 = math.erf %12 : vector<32x1xf32>
    %cst_7 = arith.constant 1.000000e+00 : f32
    %14 = vector.broadcast %cst_7 : f32 to vector<32x1xf32>
    %15 = arith.addf %14, %13 : vector<32x1xf32>
    %16 = arith.mulf %10, %15 : vector<32x1xf32>
    %17 = vector.broadcast %16 : vector<32x1xf32> to vector<32x1024xf32>
    %18 = arith.addf %0, %17 : vector<32x1024xf32>
    %c0_8 = arith.constant 0 : index
    %c0_9 = arith.constant 0 : index
    %19 = vector.load %arg4[%c0_8, %c0_9] : memref<32x1024xf32, #tpu.memory_space<vmem>>, vector<32x1024xf32>
    tpu.vector_store %arg4[%c0_8, %c0_9], %18 {strides = array<i32>} : memref<32x1024xf32, #tpu.memory_space<vmem>>, vector<32x1024xf32>,
    return
  }
  func.func @transform_0(%arg0: i32) -> (i32, i32) {
    %c0_i32 = arith.constant 0 : i32
    %c0_i32_0 = arith.constant 0 : i32
    return %arg0, %c0_i32 : i32, i32
  }
  func.func @transform_1(%arg0: i32) -> (i32, i32) {
    %c0_i32 = arith.constant 0 : i32
    %c0_i32_0 = arith.constant 0 : i32
    %c0_i32_1 = arith.constant 0 : i32
    return %c0_i32, %c0_i32_0 : i32, i32
  }
  func.func @transform_2(%arg0: i32) -> (i32, i32) {
    %c0_i32 = arith.constant 0 : i32
    %c0_i32_0 = arith.constant 0 : i32
    %c0_i32_1 = arith.constant 0 : i32
    return %c0_i32, %c0_i32_0 : i32, i32
  }
  func.func @transform_3(%arg0: i32) -> (i32, i32) {
    %c0_i32 = arith.constant 0 : i32
    %c0_i32_0 = arith.constant 0 : i32
    return %arg0, %c0_i32 : i32, i32
  }
}

</mosaic_0001>

<llo_original>
// kernel: model_forward.1
$region0: #{model_forward.1}
  #allocation0 [shape = 'u32[]', space=smem, size = 0x4, offset = 0x4, fixed_abs, tag = 'smem constant byte address 0x4 - core index']
  #allocation1 [shape = 'u32[72,128]{1,0:T(1,128)}', space=vmem, size = 0x9000, scoped, tag = 'internal scratch']
  #allocation2 [shape = 'f32[1,1]{1,0:T(1,128)S(6)}', space=smem, size = 0x200, scoped, tag = 'scoped memory for model_forward.1']
  %s0 = inlined_call_operand.vmem [shape: f32[64,1024], index: 0, kind: input, shape index: {}]
  %s1 = inlined_call_operand.vmem [shape: f32[1,1024], index: 1, kind: input, shape index: {}]
  %s2 = inlined_call_operand.<no memory space> [shape: f32[1,1], index: 2, kind: input, shape index: {}]
  %s3 = inlined_call_operand.hbm [shape: f32[64,1024], index: 3, kind: output, shape index: {}]
  %s4 = sld [smem:[#allocation0]]
  $region45: #{model_forward.1} parent=0
    _
  %s6 = ssub.s32 1, %s4
  %s7 = scalar_select 0, %s6, %s4
  %8 = sst [smem:[#allocation2]] %s2
  $region1: #{model_forward.1} parent=0
    #allocation3 [shape = 'u8[262144]{0}', space=vmem, size = 0x40000, scoped, tag = 'output window, operand 0']
    #allocation4 [shape = 's32[2]{0}', space=sflag, size = 0x8, scoped, tag = 'scoped memory for model_forward.1']
    %9 = vsyncpa [#allocation4], 0
    %s10 = scalar_lea.sflag [#allocation4], 1
    %11 = vsyncpa %s10, 0
    loop: start=0, step=1, limit=4
    $region2: #{model_forward.1} parent=1 // loop_pre_header
      _
    $region3: #{model_forward.1} parent=1 // loop_header
      %s13 = sphi 0, %s17
      %p14 = scmp.ge.s32.totalorder %s13, 4
      %s23 = sphi 0, %s25
      %s26 = sphi 0, %s23
      %s27 = sphi 0, %s26
      %s43 = sphi 0, %s27
      %s47 = sphi 0, %s47
      %s49 = sphi 0, %s47
      %s50 = sphi 0, %s49
      %s64 = sphi 0, %s50
      %s68 = sphi 0, %s68
      %s70 = sphi 0, %s68
      %s71 = sphi 0, %s70
      %s85 = sphi 0, %s71
      %s91 = sphi 0, %s93
      %s94 = sphi 0, %s91
      %s95 = sphi 0, %s94
      %s111 = sphi 0, %s95
    $region4: #{model_forward.1} parent=1 // loop_header_branch
      %16 = sbr.rel (%p14) target = $region8
    $region5: #{model_forward.1} parent=1 // loop_body
      %s18 = ssub.s32 %s13, 1
      %s19 = ssub.s32 %s13, 2
      %s20 = sadd.s32 %s13, 1
      %s21 = ssub.s32 %s13, %s20
      %p22 = scmp.eq.s32.totalorder %s21, 0
      %s24 = sadd.s32 %s23, 1
      %s25 = scalar_select %p22, %s23, %s24
      %p28 = pneg %p22
      %p29 = scmp.eq.s32.totalorder %s13, 1
      %p30 = por %p28, %p29
      %p31 = scmp.ne.s32.totalorder %s23, %s26
      %p32 = scmp.eq.s32.totalorder %s13, 0
      %p33 = por %p31, %p32
      %p34 = scmp.ne.s32.totalorder %s23, %s26
      %p35 = scmp.eq.s32.totalorder %s18, 1
      %p36 = por %p34, %p35
      %p37 = scmp.ne.s32.totalorder %s26, %s27
      %p38 = scmp.eq.s32.totalorder %s18, 0
      %p39 = por %p37, %p38
      %p40 = scmp.ne.s32.totalorder %s26, %s27
      %p41 = scmp.eq.s32.totalorder %s19, 1
      %p42 = por %p40, %p41
      %p44 = scmp.ne.s32.totalorder %s27, %s43
      %p45 = scmp.eq.s32.totalorder %s19, 0
      %p46 = por %p44, %p45
      %s48 = sadd.s32 %s47, 1
      %p51 = scmp.eq.s32.totalorder %s13, 1
      %p52 = scmp.ne.s32.totalorder %s47, %s49
      %p53 = scmp.eq.s32.totalorder %s13, 0
      %p54 = por %p52, %p53
      %p55 = scmp.ne.s32.totalorder %s47, %s49
      %p56 = scmp.eq.s32.totalorder %s18, 1
      %p57 = por %p55, %p56
      %p58 = scmp.ne.s32.totalorder %s49, %s50
      %p59 = scmp.eq.s32.totalorder %s18, 0
      %p60 = por %p58, %p59
      %p61 = scmp.ne.s32.totalorder %s49, %s50
      %p62 = scmp.eq.s32.totalorder %s19, 1
      %p63 = por %p61, %p62
      %p65 = scmp.ne.s32.totalorder %s50, %s64
      %p66 = scmp.eq.s32.totalorder %s19, 0
      %p67 = por %p65, %p66
      %s69 = sadd.s32 %s68, 1
      %p72 = scmp.eq.s32.totalorder %s13, 1
      %p73 = scmp.ne.s32.totalorder %s68, %s70
      %p74 = scmp.eq.s32.totalorder %s13, 0
      %p75 = por %p73, %p74
      %p76 = scmp.ne.s32.totalorder %s68, %s70
      %p77 = scmp.eq.s32.totalorder %s18, 1
      %p78 = por %p76, %p77
      %p79 = scmp.ne.s32.totalorder %s70, %s71
      %p80 = scmp.eq.s32.totalorder %s18, 0
      %p81 = por %p79, %p80
      %p82 = scmp.ne.s32.totalorder %s70, %s71
      %p83 = scmp.eq.s32.totalorder %s19, 1
      %p84 = por %p82, %p83
      %p86 = scmp.ne.s32.totalorder %s71, %s85
      %p87 = scmp.eq.s32.totalorder %s19, 0
      %p88 = por %p86, %p87
      %s89 = ssub.s32 %s13, %s20
      %p90 = scmp.eq.s32.totalorder %s89, 0
      %s92 = sadd.s32 %s91, 1
      %s93 = scalar_select %p90, %s91, %s92
      %p96 = pneg %p90
      %p97 = scmp.eq.s32.totalorder %s13, 1
      %p98 = por %p96, %p97
      %p99 = scmp.ne.s32.totalorder %s91, %s94
      %p100 = scmp.eq.s32.totalorder %s13, 0
      %p101 = por %p99, %p100
      %p102 = scmp.ne.s32.totalorder %s91, %s94
      %p103 = scmp.eq.s32.totalorder %s18, 1
      %p104 = por %p102, %p103
      %p105 = scmp.ne.s32.totalorder %s94, %s95
      %p106 = scmp.eq.s32.totalorder %s18, 0
      %p107 = por %p105, %p106
      %p108 = scmp.ne.s32.totalorder %s94, %s95
      %p109 = scmp.eq.s32.totalorder %s19, 1
      %p110 = por %p108, %p109
      %p112 = scmp.ne.s32.totalorder %s95, %s111
      %p113 = scmp.eq.s32.totalorder %s19, 0
      %p114 = por %p112, %p113
      %p115 = scmp.le.s32.totalorder 1, %s13
      %p116 = scmp.lt.s32.totalorder %s13, 3
      %p117 = pnand %p115, %p116
      %p118 = pneg %p117
      // Predicated region
      $region9: #{model_forward.1} parent=5 // pred_check
        _
      $region10: #{model_forward.1} parent=5 // pred_check_branch
        %120 = sbr.rel (%p117) target = $region12
      $region11: #{model_forward.1} parent=5 // pred_region
        %s121 = ssub.s32 %s13, 1
        // Predicated region
        $region13: #{model_forward.1} parent=11 // pred_check
          %p122 = pneg %p60
        $region14: #{model_forward.1} parent=11 // pred_check_branch
          %124 = sbr.rel (%p122) target = $region16
        $region15: #{model_forward.1} parent=11 // pred_region
          _
        $region16: #{model_forward.1} parent=11 // pred_fallthru
          _
        // Predicated region
        $region17: #{model_forward.1} parent=11 // pred_check
          %p125 = pneg %p81
        $region18: #{model_forward.1} parent=11 // pred_check_branch
          %127 = sbr.rel (%p125) target = $region20
        $region19: #{model_forward.1} parent=11 // pred_region
          _
        $region20: #{model_forward.1} parent=11 // pred_fallthru
          _
      $region12: #{model_forward.1} parent=5 // pred_fallthru
        _
      %p128 = scmp.lt.s32.totalorder %s13, 2
      // Predicated region
      $region21: #{model_forward.1} parent=5 // pred_check
        %p129 = pneg %p128
      $region22: #{model_forward.1} parent=5 // pred_check_branch
        %131 = sbr.rel (%p129) target = $region24
      $region23: #{model_forward.1} parent=5 // pred_region
        // Predicated region
        $region25: #{model_forward.1} parent=23 // pred_check
          %p132 = pneg %p33
        $region26: #{model_forward.1} parent=23 // pred_check_branch
          %134 = sbr.rel (%p132) target = $region28
        $region27: #{model_forward.1} parent=23 // pred_region
          %s135 = smul.u32 4, %s13
          %p136 = scmp.lt.s32.totalorder %s135, 7
          %s137 = scalar_select %p136, %s135, 7
          %s138 = smul.addr %s137, 8
          %s139 = smul.addr %s138, 8
          %s140 = scalar_lea.vmem %s0, %s139
          %s141 = smul.u32 4, %s13
        $region28: #{model_forward.1} parent=23 // pred_fallthru
          _
      $region24: #{model_forward.1} parent=5 // pred_fallthru
        _
      %p142 = scmp.le.s32.totalorder 1, %s13
      %p143 = scmp.lt.s32.totalorder %s13, 3
      %p144 = pnand %p142, %p143
      %p145 = pneg %p144
      // Predicated region
      $region29: #{model_forward.1} parent=5 // pred_check
        _
      $region30: #{model_forward.1} parent=5 // pred_check_branch
        %147 = sbr.rel (%p144) target = $region32
      $region31: #{model_forward.1} parent=5 // pred_region
        %s148 = ssub.s32 %s13, 1
        %s149 = smul.u32 4, %s18
        %p150 = scmp.lt.s32.totalorder %s149, 7
        %s151 = scalar_select %p150, %s149, 7
        %s152 = smul.addr %s151, 8
        %s153 = smul.addr %s152, 8
        %s154 = scalar_lea.vmem %s0, %s153
        %p155 = pneg %p39
        %p156 = pneg %p36
        %p157 = pneg %p60
        %p158 = pneg %p57
        %p159 = pneg %p81
        %p160 = pneg %p78
        %p161 = pneg %p107
        %p162 = pneg %p104
        %s163 = sand.u32 %s94, 1
        %s164 = scalar_lea.sflag [#allocation4], %s163
        %s165 = sand.u32 %s94, 1
        %s166 = smul.addr %s165, 256
        %s167 = scalar_lea.vmem [#allocation3], %s166
        %s168 = smul.u32 4, %s18
        %p169 = scmp.lt.s32.totalorder %s168, 7
        %s170 = scalar_select %p169, %s168, 7
        %s171 = smul.addr %s170, 8
        %s172 = smul.addr %s171, 8
        %s173 = scalar_lea.vmem %s0, %s172
        %s174 = smul.u32 4, %s18
        %s175 = smul.u32 4, %s18
        %v176 = vld [vmem:[%s173] sm:$0xff]
        %v177 = vld [vmem:[%s173 + $0x8] sm:$0xff]
        %v178 = vld [vmem:[%s173 + $0x10] sm:$0xff]
        %v179 = vld [vmem:[%s173 + $0x18] sm:$0xff]
        %v180 = vld [vmem:[%s173 + $0x20] sm:$0xff]
        %v181 = vld [vmem:[%s173 + $0x28] sm:$0xff]
        %v182 = vld [vmem:[%s173 + $0x30] sm:$0xff]
        %v183 = vld [vmem:[%s173 + $0x38] sm:$0xff]
        %v184 = vld [vmem:[%s173 + $0x40] sm:$0xff]
        %v185 = vld [vmem:[%s173 + $0x48] sm:$0xff]
        %v186 = vld [vmem:[%s173 + $0x50] sm:$0xff]
        %v187 = vld [vmem:[%s173 + $0x58] sm:$0xff]
        %v188 = vld [vmem:[%s173 + $0x60] sm:$0xff]
        %v189 = vld [vmem:[%s173 + $0x68] sm:$0xff]
        %v190 = vld [vmem:[%s173 + $0x70] sm:$0xff]
        %v191 = vld [vmem:[%s173 + $0x78] sm:$0xff]
        %v192 = vld [vmem:[%s173 + $0x80] sm:$0xff]
        %v193 = vld [vmem:[%s173 + $0x88] sm:$0xff]
        %v194 = vld [vmem:[%s173 + $0x90] sm:$0xff]
        %v195 = vld [vmem:[%s173 + $0x98] sm:$0xff]
        %v196 = vld [vmem:[%s173 + $0xa0] sm:$0xff]
        %v197 = vld [vmem:[%s173 + $0xa8] sm:$0xff]
        %v198 = vld [vmem:[%s173 + $0xb0] sm:$0xff]
        %v199 = vld [vmem:[%s173 + $0xb8] sm:$0xff]
        %v200 = vld [vmem:[%s173 + $0xc0] sm:$0xff]
        %v201 = vld [vmem:[%s173 + $0xc8] sm:$0xff]
        %v202 = vld [vmem:[%s173 + $0xd0] sm:$0xff]
        %v203 = vld [vmem:[%s173 + $0xd8] sm:$0xff]
        %v204 = vld [vmem:[%s173 + $0xe0] sm:$0xff]
        %v205 = vld [vmem:[%s173 + $0xe8] sm:$0xff]
        %v206 = vld [vmem:[%s173 + $0xf0] sm:$0xff]
        %v207 = vld [vmem:[%s173 + $0xf8] sm:$0xff]
        %v208 = vld [vmem:[%s1] sm:$0xff]
        %s209 = sld [smem:[#allocation2]]
        %v211 = vperm.slane %v208, 0
        %v212 = vperm.slane %v208, 1
        %v213 = vperm.slane %v208, 2
        %v214 = vperm.slane %v208, 3
        %v215 = vperm.slane %v208, 4
        %v216 = vperm.slane %v208, 5
        %v217 = vperm.slane %v208, 6
        %v218 = vperm.slane %v208, 7
        %v227 = vmul.f32 %v176, %v211
        %v228 = vmul.f32 %v177, %v212
        %v229 = vmul.f32 %v178, %v213
        %v230 = vmul.f32 %v179, %v214
        %v231 = vmul.f32 %v180, %v215
        %v232 = vmul.f32 %v181, %v216
        %v233 = vmul.f32 %v182, %v217
        %v234 = vmul.f32 %v183, %v218
        %v235 = vmul.f32 %v184, %v211
        %v236 = vmul.f32 %v185, %v212
        %v237 = vmul.f32 %v186, %v213
        %v238 = vmul.f32 %v187, %v214
        %v239 = vmul.f32 %v188, %v215
        %v240 = vmul.f32 %v189, %v216
        %v241 = vmul.f32 %v190, %v217
        %v242 = vmul.f32 %v191, %v218
        %v243 = vmul.f32 %v192, %v211
        %v244 = vmul.f32 %v193, %v212
        %v245 = vmul.f32 %v194, %v213
        %v246 = vmul.f32 %v195, %v214
        %v247 = vmul.f32 %v196, %v215
        %v248 = vmul.f32 %v197, %v216
        %v249 = vmul.f32 %v198, %v217
        %v250 = vmul.f32 %v199, %v218
        %v251 = vmul.f32 %v200, %v211
        %v252 = vmul.f32 %v201, %v212
        %v253 = vmul.f32 %v202, %v213
        %v254 = vmul.f32 %v203, %v214
        %v255 = vmul.f32 %v204, %v215
        %v256 = vmul.f32 %v205, %v216
        %v257 = vmul.f32 %v206, %v217
        %v258 = vmul.f32 %v207, %v218
        %v259 = vadd.f32 %v227, %v228
        %v260 = vadd.f32 %v259, %v229
        %v261 = vadd.f32 %v260, %v230
        %v262 = vadd.f32 %v261, %v231
        %v263 = vadd.f32 %v262, %v232
        %v264 = vadd.f32 %v263, %v233
        %v265 = vadd.f32 %v264, %v234
        %266 = vadd.xlane.f32.xlu0 %v265
        %v267 = vpop.xlane.xlu0 %266
        %v268 = vadd.f32 %v235, %v236
        %v269 = vadd.f32 %v268, %v237
        %v270 = vadd.f32 %v269, %v238
        %v271 = vadd.f32 %v270, %v239
        %v272 = vadd.f32 %v271, %v240
        %v273 = vadd.f32 %v272, %v241
        %v274 = vadd.f32 %v273, %v242
        %275 = vadd.xlane.f32.xlu0 %v274
        %v276 = vpop.xlane.xlu0 %275
        %v277 = vadd.f32 %v243, %v244
        %v278 = vadd.f32 %v277, %v245
        %v279 = vadd.f32 %v278, %v246
        %v280 = vadd.f32 %v279, %v247
        %v281 = vadd.f32 %v280, %v248
        %v282 = vadd.f32 %v281, %v249
        %v283 = vadd.f32 %v282, %v250
        %284 = vadd.xlane.f32.xlu0 %v283
        %v285 = vpop.xlane.xlu0 %284
        %v286 = vadd.f32 %v251, %v252
        %v287 = vadd.f32 %v286, %v253
        %v288 = vadd.f32 %v287, %v254
        %v289 = vadd.f32 %v288, %v255
        %v290 = vadd.f32 %v289, %v256
        %v291 = vadd.f32 %v290, %v257
        %v292 = vadd.f32 %v291, %v258
        %293 = vadd.xlane.f32.xlu0 %v292
        %v294 = vpop.xlane.xlu0 %293
        %v295 = vstv %s209
        %v296 = vadd.f32 %v267, %v295
        %v297 = vadd.f32 %v276, %v295
        %v298 = vadd.f32 %v285, %v295
        %v299 = vadd.f32 %v294, %v295
        %v300 = vmul.f32 %v296, 0.5
        %v301 = vmul.f32 %v297, 0.5
        %v302 = vmul.f32 %v298, 0.5
        %v303 = vmul.f32 %v299, 0.5
        %v304 = vmul.f32 %v296, 0.70710677
        %v305 = vmul.f32 %v297, 0.70710677
        %v306 = vmul.f32 %v298, 0.70710677
        %v307 = vmul.f32 %v299, 0.70710677
        %v308 = vmul.f32 %v304, %v304
        %v309 = vmin.f32 16.0, %v308
        %v310 = vmul.f32 %v309, 2.1237322e-06
        %v311 = vadd.f32 %v310, 0.00028619796
        %v312 = vmul.f32 %v309, %v311
        %v313 = vadd.f32 %v312, 0.0036580483
        %v314 = vmul.f32 %v309, %v313
        %v315 = vadd.f32 %v314, 0.05243302
        %v316 = vmul.f32 %v309, %v315
        %v317 = vadd.f32 %v316, 0.18741608
        %v318 = vmul.f32 %v309, %v317
        %v319 = vadd.f32 %v318, 1.1283791
        %v320 = vmul.f32 %v304, %v319
        %v321 = vmul.f32 %v309, 3.8918573e-05
        %v322 = vadd.f32 %v321, 0.001143296
        %v323 = vmul.f32 %v309, %v322
        %v324 = vadd.f32 %v323, 0.014752088
        %v325 = vmul.f32 %v309, %v324
        %v326 = vadd.f32 %v325, 0.112945676
        %v327 = vmul.f32 %v309, %v326
        %v328 = vadd.f32 %v327, 0.4994258
        %v329 = vmul.f32 %v309, %v328
        %v330 = vadd.f32 %v329, 1.0
        %v331 = vrcp.pop %v330
        %v332 = vmul.f32 %v330, %v331
        %v333 = vsub.f32 1.0, %v332
        %v334 = vmul.f32 %v331, %v333
        %v335 = vadd.f32 %v331, %v334
        %vm336 = vweird.f32 %v330
        %vm337 = vweird.f32 %v331
        %vm338 = vmor %vm336, %vm337
        %v339 = vsel %vm338, %v331, %v335
        %v340 = vand.u32 2147483647, %v330
        %vm341 = vcmp.eq.f32.partialorder %v340, 8.507059e+37
        %v342 = vand.u32 %v330, 2147483648
        %v343 = vor.u32 1.1754944e-38, %v342
        %v344 = vsel %vm341, %v343, %v339
        %v345 = vmul.f32 %v320, %v344
        %v346 = vmin.f32 %v345, 1.0
        %v347 = vmax.f32 %v346, -1.0
        %v348 = vmul.f32 %v305, %v305
        %v349 = vmin.f32 16.0, %v348
        %v350 = vmul.f32 %v349, 2.1237322e-06
        %v351 = vadd.f32 %v350, 0.00028619796
        %v352 = vmul.f32 %v349, %v351
        %v353 = vadd.f32 %v352, 0.0036580483
        %v354 = vmul.f32 %v349, %v353
        %v355 = vadd.f32 %v354, 0.05243302
        %v356 = vmul.f32 %v349, %v355
        %v357 = vadd.f32 %v356, 0.18741608
        %v358 = vmul.f32 %v349, %v357
        %v359 = vadd.f32 %v358, 1.1283791
        %v360 = vmul.f32 %v305, %v359
        %v361 = vmul.f32 %v349, 3.8918573e-05
        %v362 = vadd.f32 %v361, 0.001143296
        %v363 = vmul.f32 %v349, %v362
        %v364 = vadd.f32 %v363, 0.014752088
        %v365 = vmul.f32 %v349, %v364
        %v366 = vadd.f32 %v365, 0.112945676
        %v367 = vmul.f32 %v349, %v366
        %v368 = vadd.f32 %v367, 0.4994258
        %v369 = vmul.f32 %v349, %v368
        %v370 = vadd.f32 %v369, 1.0
        %v371 = vrcp.pop %v370
        %v372 = vmul.f32 %v370, %v371
        %v373 = vsub.f32 1.0, %v372
        %v374 = vmul.f32 %v371, %v373
        %v375 = vadd.f32 %v371, %v374
        %vm376 = vweird.f32 %v370
        %vm377 = vweird.f32 %v371
        %vm378 = vmor %vm376, %vm377
        %v379 = vsel %vm378, %v371, %v375
        %v380 = vand.u32 2147483647, %v370
        %vm381 = vcmp.eq.f32.partialorder %v380, 8.507059e+37
        %v382 = vand.u32 %v370, 2147483648
        %v383 = vor.u32 1.1754944e-38, %v382
        %v384 = vsel %vm381, %v383, %v379
        %v385 = vmul.f32 %v360, %v384
        %v386 = vmin.f32 %v385, 1.0
        %v387 = vmax.f32 %v386, -1.0
        %v388 = vmul.f32 %v306, %v306
        %v389 = vmin.f32 16.0, %v388
        %v390 = vmul.f32 %v389, 2.1237322e-06
        %v391 = vadd.f32 %v390, 0.00028619796
        %v392 = vmul.f32 %v389, %v391
        %v393 = vadd.f32 %v392, 0.0036580483
        %v394 = vmul.f32 %v389, %v393
        %v395 = vadd.f32 %v394, 0.05243302
        %v396 = vmul.f32 %v389, %v395
        %v397 = vadd.f32 %v396, 0.18741608
        %v398 = vmul.f32 %v389, %v397
        %v399 = vadd.f32 %v398, 1.1283791
        %v400 = vmul.f32 %v306, %v399
        %v401 = vmul.f32 %v389, 3.8918573e-05
        %v402 = vadd.f32 %v401, 0.001143296
        %v403 = vmul.f32 %v389, %v402
        %v404 = vadd.f32 %v403, 0.014752088
        %v405 = vmul.f32 %v389, %v404
        %v406 = vadd.f32 %v405, 0.112945676
        %v407 = vmul.f32 %v389, %v406
        %v408 = vadd.f32 %v407, 0.4994258
        %v409 = vmul.f32 %v389, %v408
        %v410 = vadd.f32 %v409, 1.0
        %v411 = vrcp.pop %v410
        %v412 = vmul.f32 %v410, %v411
        %v413 = vsub.f32 1.0, %v412
        %v414 = vmul.f32 %v411, %v413
        %v415 = vadd.f32 %v411, %v414
        %vm416 = vweird.f32 %v410
        %vm417 = vweird.f32 %v411
        %vm418 = vmor %vm416, %vm417
        %v419 = vsel %vm418, %v411, %v415
        %v420 = vand.u32 2147483647, %v410
        %vm421 = vcmp.eq.f32.partialorder %v420, 8.507059e+37
        %v422 = vand.u32 %v410, 2147483648
        %v423 = vor.u32 1.1754944e-38, %v422
        %v424 = vsel %vm421, %v423, %v419
        %v425 = vmul.f32 %v400, %v424
        %v426 = vmin.f32 %v425, 1.0
        %v427 = vmax.f32 %v426, -1.0
        %v428 = vmul.f32 %v307, %v307
        %v429 = vmin.f32 16.0, %v428
        %v430 = vmul.f32 %v429, 2.1237322e-06
        %v431 = vadd.f32 %v430, 0.00028619796
        %v432 = vmul.f32 %v429, %v431
        %v433 = vadd.f32 %v432, 0.0036580483
        %v434 = vmul.f32 %v429, %v433
        %v435 = vadd.f32 %v434, 0.05243302
        %v436 = vmul.f32 %v429, %v435
        %v437 = vadd.f32 %v436, 0.18741608
        %v438 = vmul.f32 %v429, %v437
        %v439 = vadd.f32 %v438, 1.1283791
        %v440 = vmul.f32 %v307, %v439
        %v441 = vmul.f32 %v429, 3.8918573e-05
        %v442 = vadd.f32 %v441, 0.001143296
        %v443 = vmul.f32 %v429, %v442
        %v444 = vadd.f32 %v443, 0.014752088
        %v445 = vmul.f32 %v429, %v444
        %v446 = vadd.f32 %v445, 0.112945676
        %v447 = vmul.f32 %v429, %v446
        %v448 = vadd.f32 %v447, 0.4994258
        %v449 = vmul.f32 %v429, %v448
        %v450 = vadd.f32 %v449, 1.0
        %v451 = vrcp.pop %v450
        %v452 = vmul.f32 %v450, %v451
        %v453 = vsub.f32 1.0, %v452
        %v454 = vmul.f32 %v451, %v453
        %v455 = vadd.f32 %v451, %v454
        %vm456 = vweird.f32 %v450
        %vm457 = vweird.f32 %v451
        %vm458 = vmor %vm456, %vm457
        %v459 = vsel %vm458, %v451, %v455
        %v460 = vand.u32 2147483647, %v450
        %vm461 = vcmp.eq.f32.partialorder %v460, 8.507059e+37
        %v462 = vand.u32 %v450, 2147483648
        %v463 = vor.u32 1.1754944e-38, %v462
        %v464 = vsel %vm461, %v463, %v459
        %v465 = vmul.f32 %v440, %v464
        %v466 = vmin.f32 %v465, 1.0
        %v467 = vmax.f32 %v466, -1.0
        %v468 = vadd.f32 %v347, 1.0
        %v469 = vadd.f32 %v387, 1.0
        %v470 = vadd.f32 %v427, 1.0
        %v471 = vadd.f32 %v467, 1.0
        %v472 = vmul.f32 %v300, %v468
        %v473 = vmul.f32 %v301, %v469
        %v474 = vmul.f32 %v302, %v470
        %v475 = vmul.f32 %v303, %v471
        %v476 = vadd.f32 %v176, %v472
        %v477 = vadd.f32 %v177, %v472
        %v478 = vadd.f32 %v178, %v472
        %v479 = vadd.f32 %v179, %v472
        %v480 = vadd.f32 %v180, %v472
        %v481 = vadd.f32 %v181, %v472
        %v482 = vadd.f32 %v182, %v472
        %v483 = vadd.f32 %v183, %v472
        %v484 = vadd.f32 %v184, %v473
        %v485 = vadd.f32 %v185, %v473
        %v486 = vadd.f32 %v186, %v473
        %v487 = vadd.f32 %v187, %v473
        %v488 = vadd.f32 %v188, %v473
        %v489 = vadd.f32 %v189, %v473
        %v490 = vadd.f32 %v190, %v473
        %v491 = vadd.f32 %v191, %v473
        %v492 = vadd.f32 %v192, %v474
        %v493 = vadd.f32 %v193, %v474
        %v494 = vadd.f32 %v194, %v474
        %v495 = vadd.f32 %v195, %v474
        %v496 = vadd.f32 %v196, %v474
        %v497 = vadd.f32 %v197, %v474
        %v498 = vadd.f32 %v198, %v474
        %v499 = vadd.f32 %v199, %v474
        %v500 = vadd.f32 %v200, %v475
        %v501 = vadd.f32 %v201, %v475
        %v502 = vadd.f32 %v202, %v475
        %v503 = vadd.f32 %v203, %v475
        %v504 = vadd.f32 %v204, %v475
        %v505 = vadd.f32 %v205, %v475
        %v506 = vadd.f32 %v206, %v475
        %v507 = vadd.f32 %v207, %v475
        %508 = vst [vmem:[%s167] sm:$0xff] %v476
        %509 = vst [vmem:[%s167 + $0x8] sm:$0xff] %v477
        %510 = vst [vmem:[%s167 + $0x10] sm:$0xff] %v478
        %511 = vst [vmem:[%s167 + $0x18] sm:$0xff] %v479
        %512 = vst [vmem:[%s167 + $0x20] sm:$0xff] %v480
        %513 = vst [vmem:[%s167 + $0x28] sm:$0xff] %v481
        %514 = vst [vmem:[%s167 + $0x30] sm:$0xff] %v482
        %515 = vst [vmem:[%s167 + $0x38] sm:$0xff] %v483
        %516 = vst [vmem:[%s167 + $0x40] sm:$0xff] %v484
        %517 = vst [vmem:[%s167 + $0x48] sm:$0xff] %v485
        %518 = vst [vmem:[%s167 + $0x50] sm:$0xff] %v486
        %519 = vst [vmem:[%s167 + $0x58] sm:$0xff] %v487
        %520 = vst [vmem:[%s167 + $0x60] sm:$0xff] %v488
        %521 = vst [vmem:[%s167 + $0x68] sm:$0xff] %v489
        %522 = vst [vmem:[%s167 + $0x70] sm:$0xff] %v490
        %523 = vst [vmem:[%s167 + $0x78] sm:$0xff] %v491
        %524 = vst [vmem:[%s167 + $0x80] sm:$0xff] %v492
        %525 = vst [vmem:[%s167 + $0x88] sm:$0xff] %v493
        %526 = vst [vmem:[%s167 + $0x90] sm:$0xff] %v494
        %527 = vst [vmem:[%s167 + $0x98] sm:$0xff] %v495
        %528 = vst [vmem:[%s167 + $0xa0] sm:$0xff] %v496
        %529 = vst [vmem:[%s167 + $0xa8] sm:$0xff] %v497
        %530 = vst [vmem:[%s167 + $0xb0] sm:$0xff] %v498
        %531 = vst [vmem:[%s167 + $0xb8] sm:$0xff] %v499
        %532 = vst [vmem:[%s167 + $0xc0] sm:$0xff] %v500
        %533 = vst [vmem:[%s167 + $0xc8] sm:$0xff] %v501
        %534 = vst [vmem:[%s167 + $0xd0] sm:$0xff] %v502
        %535 = vst [vmem:[%s167 + $0xd8] sm:$0xff] %v503
        %536 = vst [vmem:[%s167 + $0xe0] sm:$0xff] %v504
        %537 = vst [vmem:[%s167 + $0xe8] sm:$0xff] %v505
        %538 = vst [vmem:[%s167 + $0xf0] sm:$0xff] %v506
        %539 = vst [vmem:[%s167 + $0xf8] sm:$0xff] %v507
        %s540 = sand.u32 %s94, 1
        %s541 = scalar_lea.sflag [#allocation4], %s540
        %s542 = sand.u32 %s94, 1
        %s543 = smul.addr %s542, 256
        %s544 = scalar_lea.vmem [#allocation3], %s543
        // Predicated region
        $region33: #{model_forward.1} parent=31 // pred_check
          %p545 = pneg %p104
        $region34: #{model_forward.1} parent=31 // pred_check_branch
          %547 = sbr.rel (%p545) target = $region36
        $region35: #{model_forward.1} parent=31 // pred_region
          %s548 = smul.u32 4, %s18
          %550 = vsyncadd %s541, 0
          %s551 = smul.addr %s548, 8
          %s552 = smul.addr %s551, 8
          %s553 = scalar_lea.hbm %s3, %s552
          %s554 = sshll.u32 %s544, 4
          %s555 = int_to_ptr.vmem [resolvable:$true] %s554
          %s556 = sshll.u32 %s553, 4
          %s557 = int_to_ptr.hbm [resolvable:$true] %s556
          %562 = dma.vmem_to_hbm [thread:$0]  %s555, 4096, %s557, %s541, 1024, 1024, 64
        $region36: #{model_forward.1} parent=31 // pred_fallthru
          _
      $region32: #{model_forward.1} parent=5 // pred_fallthru
        _
      %p563 = scmp.le.s32.totalorder 2, %s13
      // Predicated region
      $region37: #{model_forward.1} parent=5 // pred_check
        %p564 = pneg %p563
      $region38: #{model_forward.1} parent=5 // pred_check_branch
        %566 = sbr.rel (%p564) target = $region40
      $region39: #{model_forward.1} parent=5 // pred_region
        %s567 = ssub.s32 %s13, 2
        // Predicated region
        $region41: #{model_forward.1} parent=39 // pred_check
          %p568 = pneg %p110
        $region42: #{model_forward.1} parent=39 // pred_check_branch
          %570 = sbr.rel (%p568) target = $region44
        $region43: #{model_forward.1} parent=39 // pred_region
          %s571 = sand.u32 %s95, 1
          %s572 = scalar_lea.sflag [#allocation4], %s571
          %s573 = sand.u32 %s95, 1
          %s574 = smul.addr %s573, 256
          %s575 = scalar_lea.vmem [#allocation3], %s574
          %577 = dma.done %s572, 4096
        $region44: #{model_forward.1} parent=39 // pred_fallthru
          _
      $region40: #{model_forward.1} parent=5 // pred_fallthru
        _
    $region6: #{model_forward.1} parent=1 // loop_footer
      %s17 = sadd.s32 1, %s13
    $region7: #{model_forward.1} parent=1 // loop_footer_branch
      %12 = sbr.rel target = $region3
    $region8: #{model_forward.1} parent=1 // loop_exit
      _
    %578 = vsyncpa [#allocation4], 1
    %s579 = scalar_lea.sflag [#allocation4], 1
    %580 = vsyncpa %s579, 1

</llo_original>
